<compile_context>
chip_gen: v5e
topology: v5e:2x2
jax: 0.10.0
libtpu: 0.0.40
codegen_flags: <defaults>
</compile_context>

<pallas_src>
import functools

import jax
import jax.numpy as jnp
from jax import lax
from jax.experimental import pallas as pl
from jax.experimental.pallas import tpu as pltpu

C_IN = 3
K = 3


def _conv_kernel(x_ref, wb_ref, o_ref, *, H, W):
    # x_ref : (C_IN, N, H*W) f32 VMEM  -- batch on sublanes, flat plane on lanes
    # wb_ref: (C_IN*K*K + 1,) f32 SMEM -- weights [c*9 + kh*3 + kw], then bias
    # o_ref : (N, H*W)       f32 VMEM  -- lane-dense output planes
    HW = H * W
    x0 = x_ref[0]                                  # (N, HW)
    x1 = x_ref[1]
    x2 = x_ref[2]

    # Flattened-position indices -> validity masks for the 8 halo taps.
    # Built once (corner masks = row AND col, precomputed per review note).
    pos = lax.broadcasted_iota(jnp.int32, (1, HW), 1)
    if (W & (W - 1)) == 0:
        col = jnp.bitwise_and(pos, W - 1)          # cheap bit-op, W power of 2
    else:
        col = pos % W
    top_ok = pos >= W                              # source row i-1 >= 0
    bot_ok = pos < HW - W                          # source row i+1 <= H-1
    left_ok = col >= 1                             # source col j-1 >= 0
    right_ok = col <= W - 2                        # source col j+1 <= W-1
    row_masks = (top_ok, None, bot_ok)
    col_masks = (left_ok, None, right_ok)
    masks = [[None] * K for _ in range(K)]
    for kh in range(K):
        for kw in range(K):
            rm, cm = row_masks[kh], col_masks[kw]
            if rm is not None and cm is not None:
                masks[kh][kw] = jnp.logical_and(rm, cm)
            else:
                masks[kh][kw] = rm if rm is not None else cm

    # Bias folded into the accumulator init.
    acc = jnp.full(x0.shape, wb_ref[C_IN * K * K], jnp.float32)

    # Statically unrolled 3x3 taps.  Per tap: combine channels with SMEM
    # scalar weights (VPU, all N images per vreg), shift the combined plane by
    # one lane rotation (XLU), mask out-of-image contributions, accumulate.
    for kh in range(K):
        for kw in range(K):
            t = kh * K + kw
            tap = (x0 * wb_ref[t]
                   + x1 * wb_ref[K * K + t]
                   + x2 * wb_ref[2 * K * K + t])
            s = (kh - 1) * W + (kw - 1)            # flattened source offset
            if s != 0:
                # want shifted[:, p] == tap[:, p + s] -> roll by (-s) mod HW.
                # Roll is per sublane row, so images never mix; the in-image
                # wrap-around is killed by the masks below.
                tap = pltpu.roll(tap, (-s) % HW, axis=1)
            m = masks[kh][kw]
            if m is not None:
                tap = jnp.where(m, tap, 0.0)       # (1,HW) mask bcast over N
            acc = acc + tap

    o_ref[...] = acc


@jax.jit
def conv2d_3to1_pallas(x, weight, bias):
    """x: (N, 3, H, W); weight: (1, 3, 3, 3); bias: (1,) -> (N, 1, H, W) f32."""
    N, C, H, W = x.shape
    assert C == C_IN
    HW = H * W

    # Layout plumbing only (fused under jit): channels -> leading "tile" dim,
    # batch -> sublane dim, flattened H*W -> lane dim (256 lanes, unmasked).
    xf = jnp.transpose(x, (1, 0, 2, 3)).reshape(C_IN, N, HW).astype(jnp.float32)
    wb = jnp.concatenate(
        [weight.reshape(C_IN * K * K), bias.reshape(1)]).astype(jnp.float32)

    kernel = functools.partial(_conv_kernel, H=H, W=W)

    out = pl.pallas_call(
        kernel,
        out_shape=jax.ShapeDtypeStruct((N, HW), jnp.float32),
        grid_spec=pltpu.PrefetchScalarGridSpec(
            num_scalar_prefetch=0,
            grid=(1,),  # single fat step: whole problem in one block
            in_specs=[
                pl.BlockSpec((C_IN, N, HW), lambda i: (0, 0, 0)),
                # Whole (28,) array staged HBM->SMEM exactly once (single grid
                # step) -> equivalent to scalar-prefetch staging here.
                pl.BlockSpec(memory_space=pltpu.SMEM),
            ],
            out_specs=pl.BlockSpec((N, HW), lambda i: (0, 0)),
        ),
        compiler_params=pltpu.CompilerParams(
            dimension_semantics=("arbitrary",),
        ),
    )(xf, wb)
    return out.reshape(N, 1, H, W)


if __name__ == "__main__":
    key = jax.random.PRNGKey(0)
    kx, kw_, kb = jax.random.split(key, 3)

    # Small shapes consistent with the module: batch=2, channels=3, spatial=16.
    N, H, W = 2, 16, 16
    x = jax.random.normal(kx, (N, C_IN, H, W), dtype=jnp.float32)

    # Conv2d(3, 1, 3) parameter shapes: weight (1, 3, 3, 3), bias (1,).
    weight = jax.random.normal(kw_, (1, C_IN, K, K), dtype=jnp.float32) * 0.1
    bias = jax.random.normal(kb, (1,), dtype=jnp.float32) * 0.1

    out = conv2d_3to1_pallas(x, weight, bias)
    out = jax.block_until_ready(out)

    # Reference check against XLA conv (NCHW, OIHW, padding=1).
    ref = lax.conv_general_dilated(
        x, weight, window_strides=(1, 1), padding=((1, 1), (1, 1)),
        dimension_numbers=("NCHW", "OIHW", "NCHW"),
    ) + bias.reshape(1, 1, 1, 1)

    assert out.shape == (N, 1, H, W)
    assert jnp.max(jnp.abs(out - ref)) < 1e-4

    print("KERNEL_OK")
</pallas_src>

<mosaic_0001>
module attributes {stable_mosaic.version = 11 : i64} {
  func.func @_conv_kernel(%arg0: i32, %arg1: memref<3x2x256xf32, #tpu.memory_space<vmem>>, %arg2: memref<28xf32, #tpu.memory_space<smem>>, %arg3: memref<2x256xf32, #tpu.memory_space<vmem>>) attributes {dimension_semantics = [#tpu.dimension_semantics<arbitrary>], iteration_bounds = array<i64: 1>, scalar_prefetch = 0 : i64, scratch_operands = 0 : i64, tpu.core_type = #tpu.core_type<tc>, window_params = [{pipeline_mode = #tpu.pipeline_mode<synchronous>, transform_indices = @transform_0, window_bounds = array<i64: 3, 2, 256>}, {transform_indices = @transform_1, window_bounds = array<i64: 28>}, {pipeline_mode = #tpu.pipeline_mode<synchronous>, transform_indices = @transform_2, window_bounds = array<i64: 2, 256>}]} {
    %c0 = arith.constant 0 : index
    %c0_0 = arith.constant 0 : index
    %c0_1 = arith.constant 0 : index
    %0 = vector.load %arg1[%c0, %c0_0, %c0_1] : memref<3x2x256xf32, #tpu.memory_space<vmem>>, vector<1x2x256xf32>
    %1 = vector.shape_cast %0 : vector<1x2x256xf32> to vector<2x256xf32>
    %c1 = arith.constant 1 : index
    %c0_2 = arith.constant 0 : index
    %c0_3 = arith.constant 0 : index
    %2 = vector.load %arg1[%c1, %c0_2, %c0_3] : memref<3x2x256xf32, #tpu.memory_space<vmem>>, vector<1x2x256xf32>
    %3 = vector.shape_cast %2 : vector<1x2x256xf32> to vector<2x256xf32>
    %c2 = arith.constant 2 : index
    %c0_4 = arith.constant 0 : index
    %c0_5 = arith.constant 0 : index
    %4 = vector.load %arg1[%c2, %c0_4, %c0_5] : memref<3x2x256xf32, #tpu.memory_space<vmem>>, vector<1x2x256xf32>
    %5 = vector.shape_cast %4 : vector<1x2x256xf32> to vector<2x256xf32>
    %6 = tpu.iota {dimensions = array<i32: 1>} : vector<1x256xi32>
    %c15_i32 = arith.constant 15 : i32
    %7 = vector.broadcast %c15_i32 : i32 to vector<1x256xi32>
    %8 = arith.andi %6, %7 : vector<1x256xi32>
    %c16_i32 = arith.constant 16 : i32
    %9 = vector.broadcast %c16_i32 : i32 to vector<1x256xi32>
    %10 = arith.cmpi sge, %6, %9 : vector<1x256xi32>
    %c240_i32 = arith.constant 240 : i32
    %11 = vector.broadcast %c240_i32 : i32 to vector<1x256xi32>
    %12 = arith.cmpi slt, %6, %11 : vector<1x256xi32>
    %c1_i32 = arith.constant 1 : i32
    %13 = vector.broadcast %c1_i32 : i32 to vector<1x256xi32>
    %14 = arith.cmpi sge, %8, %13 : vector<1x256xi32>
    %c14_i32 = arith.constant 14 : i32
    %15 = vector.broadcast %c14_i32 : i32 to vector<1x256xi32>
    %16 = arith.cmpi sle, %8, %15 : vector<1x256xi32>
    %17 = arith.andi %10, %14 : vector<1x256xi1>
    %18 = arith.andi %10, %16 : vector<1x256xi1>
    %19 = arith.andi %12, %14 : vector<1x256xi1>
    %20 = arith.andi %12, %16 : vector<1x256xi1>
    %c27 = arith.constant 27 : index
    %21 = memref.load %arg2[%c27] : memref<28xf32, #tpu.memory_space<smem>>
    %22 = vector.broadcast %21 : f32 to vector<2x256xf32>
    %c0_6 = arith.constant 0 : index
    %23 = memref.load %arg2[%c0_6] : memref<28xf32, #tpu.memory_space<smem>>
    %24 = vector.broadcast %23 : f32 to vector<2x256xf32>
    %25 = arith.mulf %1, %24 : vector<2x256xf32>
    %c9 = arith.constant 9 : index
    %26 = memref.load %arg2[%c9] : memref<28xf32, #tpu.memory_space<smem>>
    %27 = vector.broadcast %26 : f32 to vector<2x256xf32>
    %28 = arith.mulf %3, %27 : vector<2x256xf32>
    %29 = arith.addf %25, %28 : vector<2x256xf32>
    %c18 = arith.constant 18 : index
    %30 = memref.load %arg2[%c18] : memref<28xf32, #tpu.memory_space<smem>>
    %31 = vector.broadcast %30 : f32 to vector<2x256xf32>
    %32 = arith.mulf %5, %31 : vector<2x256xf32>
    %33 = arith.addf %29, %32 : vector<2x256xf32>
    %c17_i32 = arith.constant 17 : i32
    %34 = tpu.dynamic_rotate %33 by %c17_i32 dim 1 : vector<2x256xf32>, i32 -> vector<2x256xf32>
    %cst = arith.constant 0.000000e+00 : f32
    %35 = vector.shape_cast %17 : vector<1x256xi1> to vector<1x256xi1>
    %36 = vector.broadcast %35 : vector<1x256xi1> to vector<2x256xi1>
    %37 = vector.broadcast %cst : f32 to vector<2x256xf32>
    %38 = arith.select %36, %34, %37 : vector<2x256xi1>, vector<2x256xf32>
    %39 = arith.addf %22, %38 : vector<2x256xf32>
    %c1_7 = arith.constant 1 : index
    %40 = memref.load %arg2[%c1_7] : memref<28xf32, #tpu.memory_space<smem>>
    %41 = vector.broadcast %40 : f32 to vector<2x256xf32>
    %42 = arith.mulf %1, %41 : vector<2x256xf32>
    %c10 = arith.constant 10 : index
    %43 = memref.load %arg2[%c10] : memref<28xf32, #tpu.memory_space<smem>>
    %44 = vector.broadcast %43 : f32 to vector<2x256xf32>
    %45 = arith.mulf %3, %44 : vector<2x256xf32>
    %46 = arith.addf %42, %45 : vector<2x256xf32>
    %c19 = arith.constant 19 : index
    %47 = memref.load %arg2[%c19] : memref<28xf32, #tpu.memory_space<smem>>
    %48 = vector.broadcast %47 : f32 to vector<2x256xf32>
    %49 = arith.mulf %5, %48 : vector<2x256xf32>
    %50 = arith.addf %46, %49 : vector<2x256xf32>
    %c16_i32_8 = arith.constant 16 : i32
    %51 = tpu.dynamic_rotate %50 by %c16_i32_8 dim 1 : vector<2x256xf32>, i32 -> vector<2x256xf32>
    %cst_9 = arith.constant 0.000000e+00 : f32
    %52 = vector.shape_cast %10 : vector<1x256xi1> to vector<1x256xi1>
    %53 = vector.broadcast %52 : vector<1x256xi1> to vector<2x256xi1>
    %54 = vector.broadcast %cst_9 : f32 to vector<2x256xf32>
    %55 = arith.select %53, %51, %54 : vector<2x256xi1>, vector<2x256xf32>
    %56 = arith.addf %39, %55 : vector<2x256xf32>
    %c2_10 = arith.constant 2 : index
    %57 = memref.load %arg2[%c2_10] : memref<28xf32, #tpu.memory_space<smem>>
    %58 = vector.broadcast %57 : f32 to vector<2x256xf32>
    %59 = arith.mulf %1, %58 : vector<2x256xf32>
    %c11 = arith.constant 11 : index
    %60 = memref.load %arg2[%c11] : memref<28xf32, #tpu.memory_space<smem>>
    %61 = vector.broadcast %60 : f32 to vector<2x256xf32>
    %62 = arith.mulf %3, %61 : vector<2x256xf32>
    %63 = arith.addf %59, %62 : vector<2x256xf32>
    %c20 = arith.constant 20 : index
    %64 = memref.load %arg2[%c20] : memref<28xf32, #tpu.memory_space<smem>>
    %65 = vector.broadcast %64 : f32 to vector<2x256xf32>
    %66 = arith.mulf %5, %65 : vector<2x256xf32>
    %67 = arith.addf %63, %66 : vector<2x256xf32>
    %c15_i32_11 = arith.constant 15 : i32
    %68 = tpu.dynamic_rotate %67 by %c15_i32_11 dim 1 : vector<2x256xf32>, i32 -> vector<2x256xf32>
    %cst_12 = arith.constant 0.000000e+00 : f32
    %69 = vector.shape_cast %18 : vector<1x256xi1> to vector<1x256xi1>
    %70 = vector.broadcast %69 : vector<1x256xi1> to vector<2x256xi1>
    %71 = vector.broadcast %cst_12 : f32 to vector<2x256xf32>
    %72 = arith.select %70, %68, %71 : vector<2x256xi1>, vector<2x256xf32>
    %73 = arith.addf %56, %72 : vector<2x256xf32>
    %c3 = arith.constant 3 : index
    %74 = memref.load %arg2[%c3] : memref<28xf32, #tpu.memory_space<smem>>
    %75 = vector.broadcast %74 : f32 to vector<2x256xf32>
    %76 = arith.mulf %1, %75 : vector<2x256xf32>
    %c12 = arith.constant 12 : index
    %77 = memref.load %arg2[%c12] : memref<28xf32, #tpu.memory_space<smem>>
    %78 = vector.broadcast %77 : f32 to vector<2x256xf32>
    %79 = arith.mulf %3, %78 : vector<2x256xf32>
    %80 = arith.addf %76, %79 : vector<2x256xf32>
    %c21 = arith.constant 21 : index
    %81 = memref.load %arg2[%c21] : memref<28xf32, #tpu.memory_space<smem>>
    %82 = vector.broadcast %81 : f32 to vector<2x256xf32>
    %83 = arith.mulf %5, %82 : vector<2x256xf32>
    %84 = arith.addf %80, %83 : vector<2x256xf32>
    %c1_i32_13 = arith.constant 1 : i32
    %85 = tpu.dynamic_rotate %84 by %c1_i32_13 dim 1 : vector<2x256xf32>, i32 -> vector<2x256xf32>
    %cst_14 = arith.constant 0.000000e+00 : f32
    %86 = vector.shape_cast %14 : vector<1x256xi1> to vector<1x256xi1>
    %87 = vector.broadcast %86 : vector<1x256xi1> to vector<2x256xi1>
    %88 = vector.broadcast %cst_14 : f32 to vector<2x256xf32>
    %89 = arith.select %87, %85, %88 : vector<2x256xi1>, vector<2x256xf32>
    %90 = arith.addf %73, %89 : vector<2x256xf32>
    %c4 = arith.constant 4 : index
    %91 = memref.load %arg2[%c4] : memref<28xf32, #tpu.memory_space<smem>>
    %92 = vector.broadcast %91 : f32 to vector<2x256xf32>
    %93 = arith.mulf %1, %92 : vector<2x256xf32>
    %c13 = arith.constant 13 : index
    %94 = memref.load %arg2[%c13] : memref<28xf32, #tpu.memory_space<smem>>
    %95 = vector.broadcast %94 : f32 to vector<2x256xf32>
    %96 = arith.mulf %3, %95 : vector<2x256xf32>
    %97 = arith.addf %93, %96 : vector<2x256xf32>
    %c22 = arith.constant 22 : index
    %98 = memref.load %arg2[%c22] : memref<28xf32, #tpu.memory_space<smem>>
    %99 = vector.broadcast %98 : f32 to vector<2x256xf32>
    %100 = arith.mulf %5, %99 : vector<2x256xf32>
    %101 = arith.addf %97, %100 : vector<2x256xf32>
    %102 = arith.addf %90, %101 : vector<2x256xf32>
    %c5 = arith.constant 5 : index
    %103 = memref.load %arg2[%c5] : memref<28xf32, #tpu.memory_space<smem>>
    %104 = vector.broadcast %103 : f32 to vector<2x256xf32>
    %105 = arith.mulf %1, %104 : vector<2x256xf32>
    %c14 = arith.constant 14 : index
    %106 = memref.load %arg2[%c14] : memref<28xf32, #tpu.memory_space<smem>>
    %107 = vector.broadcast %106 : f32 to vector<2x256xf32>
    %108 = arith.mulf %3, %107 : vector<2x256xf32>
    %109 = arith.addf %105, %108 : vector<2x256xf32>
    %c23 = arith.constant 23 : index
    %110 = memref.load %arg2[%c23] : memref<28xf32, #tpu.memory_space<smem>>
    %111 = vector.broadcast %110 : f32 to vector<2x256xf32>
    %112 = arith.mulf %5, %111 : vector<2x256xf32>
    %113 = arith.addf %109, %112 : vector<2x256xf32>
    %c255_i32 = arith.constant 255 : i32
    %114 = tpu.dynamic_rotate %113 by %c255_i32 dim 1 : vector<2x256xf32>, i32 -> vector<2x256xf32>
    %cst_15 = arith.constant 0.000000e+00 : f32
    %115 = vector.shape_cast %16 : vector<1x256xi1> to vector<1x256xi1>
    %116 = vector.broadcast %115 : vector<1x256xi1> to vector<2x256xi1>
    %117 = vector.broadcast %cst_15 : f32 to vector<2x256xf32>
    %118 = arith.select %116, %114, %117 : vector<2x256xi1>, vector<2x256xf32>
    %119 = arith.addf %102, %118 : vector<2x256xf32>
    %c6 = arith.constant 6 : index
    %120 = memref.load %arg2[%c6] : memref<28xf32, #tpu.memory_space<smem>>
    %121 = vector.broadcast %120 : f32 to vector<2x256xf32>
    %122 = arith.mulf %1, %121 : vector<2x256xf32>
    %c15 = arith.constant 15 : index
    %123 = memref.load %arg2[%c15] : memref<28xf32, #tpu.memory_space<smem>>
    %124 = vector.broadcast %123 : f32 to vector<2x256xf32>
    %125 = arith.mulf %3, %124 : vector<2x256xf32>
    %126 = arith.addf %122, %125 : vector<2x256xf32>
    %c24 = arith.constant 24 : index
    %127 = memref.load %arg2[%c24] : memref<28xf32, #tpu.memory_space<smem>>
    %128 = vector.broadcast %127 : f32 to vector<2x256xf32>
    %129 = arith.mulf %5, %128 : vector<2x256xf32>
    %130 = arith.addf %126, %129 : vector<2x256xf32>
    %c241_i32 = arith.constant 241 : i32
    %131 = tpu.dynamic_rotate %130 by %c241_i32 dim 1 : vector<2x256xf32>, i32 -> vector<2x256xf32>
    %cst_16 = arith.constant 0.000000e+00 : f32
    %132 = vector.shape_cast %19 : vector<1x256xi1> to vector<1x256xi1>
    %133 = vector.broadcast %132 : vector<1x256xi1> to vector<2x256xi1>
    %134 = vector.broadcast %cst_16 : f32 to vector<2x256xf32>
    %135 = arith.select %133, %131, %134 : vector<2x256xi1>, vector<2x256xf32>
    %136 = arith.addf %119, %135 : vector<2x256xf32>
    %c7 = arith.constant 7 : index
    %137 = memref.load %arg2[%c7] : memref<28xf32, #tpu.memory_space<smem>>
    %138 = vector.broadcast %137 : f32 to vector<2x256xf32>
    %139 = arith.mulf %1, %138 : vector<2x256xf32>
    %c16 = arith.constant 16 : index
    %140 = memref.load %arg2[%c16] : memref<28xf32, #tpu.memory_space<smem>>
    %141 = vector.broadcast %140 : f32 to vector<2x256xf32>
    %142 = arith.mulf %3, %141 : vector<2x256xf32>
    %143 = arith.addf %139, %142 : vector<2x256xf32>
    %c25 = arith.constant 25 : index
    %144 = memref.load %arg2[%c25] : memref<28xf32, #tpu.memory_space<smem>>
    %145 = vector.broadcast %144 : f32 to vector<2x256xf32>
    %146 = arith.mulf %5, %145 : vector<2x256xf32>
    %147 = arith.addf %143, %146 : vector<2x256xf32>
    %c240_i32_17 = arith.constant 240 : i32
    %148 = tpu.dynamic_rotate %147 by %c240_i32_17 dim 1 : vector<2x256xf32>, i32 -> vector<2x256xf32>
    %cst_18 = arith.constant 0.000000e+00 : f32
    %149 = vector.shape_cast %12 : vector<1x256xi1> to vector<1x256xi1>
    %150 = vector.broadcast %149 : vector<1x256xi1> to vector<2x256xi1>
    %151 = vector.broadcast %cst_18 : f32 to vector<2x256xf32>
    %152 = arith.select %150, %148, %151 : vector<2x256xi1>, vector<2x256xf32>
    %153 = arith.addf %136, %152 : vector<2x256xf32>
    %c8 = arith.constant 8 : index
    %154 = memref.load %arg2[%c8] : memref<28xf32, #tpu.memory_space<smem>>
    %155 = vector.broadcast %154 : f32 to vector<2x256xf32>
    %156 = arith.mulf %1, %155 : vector<2x256xf32>
    %c17 = arith.constant 17 : index
    %157 = memref.load %arg2[%c17] : memref<28xf32, #tpu.memory_space<smem>>
    %158 = vector.broadcast %157 : f32 to vector<2x256xf32>
    %159 = arith.mulf %3, %158 : vector<2x256xf32>
    %160 = arith.addf %156, %159 : vector<2x256xf32>
    %c26 = arith.constant 26 : index
    %161 = memref.load %arg2[%c26] : memref<28xf32, #tpu.memory_space<smem>>
    %162 = vector.broadcast %161 : f32 to vector<2x256xf32>
    %163 = arith.mulf %5, %162 : vector<2x256xf32>
    %164 = arith.addf %160, %163 : vector<2x256xf32>
    %c239_i32 = arith.constant 239 : i32
    %165 = tpu.dynamic_rotate %164 by %c239_i32 dim 1 : vector<2x256xf32>, i32 -> vector<2x256xf32>
    %cst_19 = arith.constant 0.000000e+00 : f32
    %166 = vector.shape_cast %20 : vector<1x256xi1> to vector<1x256xi1>
    %167 = vector.broadcast %166 : vector<1x256xi1> to vector<2x256xi1>
    %168 = vector.broadcast %cst_19 : f32 to vector<2x256xf32>
    %169 = arith.select %167, %165, %168 : vector<2x256xi1>, vector<2x256xf32>
    %170 = arith.addf %153, %169 : vector<2x256xf32>
    %c0_20 = arith.constant 0 : index
    %c0_21 = arith.constant 0 : index
    %171 = vector.load %arg3[%c0_20, %c0_21] : memref<2x256xf32, #tpu.memory_space<vmem>>, vector<2x256xf32>
    tpu.vector_store %arg3[%c0_20, %c0_21], %170 {strides = array<i32>} : memref<2x256xf32, #tpu.memory_space<vmem>>, vector<2x256xf32>,
    return
  }
  func.func @transform_0(%arg0: i32) -> (i32, i32, i32) {
    %c0_i32 = arith.constant 0 : i32
    %c0_i32_0 = arith.constant 0 : i32
    %c0_i32_1 = arith.constant 0 : i32
    %c0_i32_2 = arith.constant 0 : i32
    return %c0_i32, %c0_i32_0, %c0_i32_1 : i32, i32, i32
  }
  func.func @transform_1(%arg0: i32) -> i32 {
    %c0_i32 = arith.constant 0 : i32
    %c0_i32_0 = arith.constant 0 : i32
    return %c0_i32 : i32
  }
  func.func @transform_2(%arg0: i32) -> (i32, i32) {
    %c0_i32 = arith.constant 0 : i32
    %c0_i32_0 = arith.constant 0 : i32
    %c0_i32_1 = arith.constant 0 : i32
    return %c0_i32, %c0_i32_0 : i32, i32
  }
}

</mosaic_0001>

<llo_original>
// kernel: conv2d_3to1_pallas.1
$region0: #{conv2d_3to1_pallas.1}
  #allocation0 [shape = 'u32[]', space=smem, size = 0x4, offset = 0x4, fixed_abs, tag = 'smem constant byte address 0x4 - core index']
  #allocation1 [shape = 'u32[72,128]{1,0:T(1,128)}', space=vmem, size = 0x9000, scoped, tag = 'internal scratch']
  %s0 = inlined_call_operand.vmem [shape: f32[3,2,256], index: 0, kind: input, shape index: {}]
  %s1 = inlined_call_operand.vmem [shape: f32[28], index: 1, kind: input, shape index: {}]
  %s2 = inlined_call_operand.vmem [shape: f32[2,256], index: 2, kind: output, shape index: {}]
  %s3 = sld [smem:[#allocation0]]
  $region22: #{conv2d_3to1_pallas.1} parent=0
    _
  %s5 = ssub.s32 1, %s3
  %s6 = scalar_select 0, %s5, %s3
  $region1: #{conv2d_3to1_pallas.1} parent=0
    #allocation2 [shape = 'u8[512]{0}', space=smem, size = 0x200, scoped, tag = 'input window, operand 1, single buffered']
    #allocation3 [shape = 's32[1]{0}', space=sflag, size = 0x4, scoped, tag = 'scoped memory for conv2d_3to1_pallas.1']
    %7 = vsyncpa [#allocation3], 0
    // Predicated region
    $region2: #{conv2d_3to1_pallas.1} parent=1 // pred_check
      _
    $region3: #{conv2d_3to1_pallas.1} parent=1 // pred_check_branch
      %9 = sbr.rel (0) target = $region5
    $region4: #{conv2d_3to1_pallas.1} parent=1 // pred_region
      _
    $region5: #{conv2d_3to1_pallas.1} parent=1 // pred_fallthru
      _
    // Predicated region
    $region6: #{conv2d_3to1_pallas.1} parent=1 // pred_check
      _
    $region7: #{conv2d_3to1_pallas.1} parent=1 // pred_check_branch
      %11 = sbr.rel (0) target = $region9
    $region8: #{conv2d_3to1_pallas.1} parent=1 // pred_region
      %13 = vsyncadd [#allocation3], 0
      %s15 = sshll.u32 %s1, 4
      %s16 = int_to_ptr.vmem [resolvable:$true] %s15
      %18 = dma.vmem_to_smem %s16, 16, [#allocation2], [#allocation3]
    $region9: #{conv2d_3to1_pallas.1} parent=1 // pred_fallthru
      _
    // Predicated region
    $region10: #{conv2d_3to1_pallas.1} parent=1 // pred_check
      _
    $region11: #{conv2d_3to1_pallas.1} parent=1 // pred_check_branch
      %20 = sbr.rel (0) target = $region13
    $region12: #{conv2d_3to1_pallas.1} parent=1 // pred_region
      %22 = dma.done [#allocation3], 16
    $region13: #{conv2d_3to1_pallas.1} parent=1 // pred_fallthru
      _
    %23 = sfence
    %v24 = vld [vmem:[%s0] sm:$0xf]
    %s25 = scalar_lea.vmem %s0, 4
    %v26 = vld [vmem:[%s25] sm:$0xf]
    %s27 = scalar_lea.vmem %s0, 8
    %v28 = vld [vmem:[%s27] sm:$0xf]
    %v29 = vlaneseq
    %v30 = vand.u32 %v29, 127
    %v31 = vadd.s32 %v30, 128
    %v32 = vand.u32 %v30, 15
    %v33 = vand.u32 %v31, 15
    %vm34 = vcmp.ge.s32.totalorder %v30, 16
    %vm35 = vcmp.ge.s32.totalorder %v31, 16
    %vm36 = vcmp.lt.s32.totalorder %v30, 240
    %vm37 = vcmp.lt.s32.totalorder %v31, 240
    %vm38 = vcmp.ge.s32.totalorder %v32, 1
    %vm39 = vcmp.ge.s32.totalorder %v33, 1
    %vm40 = vcmp.le.s32.totalorder %v32, 14
    %vm41 = vcmp.le.s32.totalorder %v33, 14
    %vm42 = vmand %vm34, %vm38
    %vm43 = vmand %vm35, %vm39
    %vm44 = vmand %vm34, %vm40
    %vm45 = vmand %vm35, %vm41
    %vm46 = vmand %vm36, %vm38
    %vm47 = vmand %vm37, %vm39
    %vm48 = vmand %vm36, %vm40
    %vm49 = vmand %vm37, %vm41
    %s50 = sld [smem:[#allocation2 + $0x1b]]
    %v51 = vstv %s50
    %s52 = sld [smem:[#allocation2]]
    %v53 = vstv %s52
    %v54 = vmul.f32 %v24, %v53
    %s55 = sld [smem:[#allocation2 + $0x9]]
    %v56 = vstv %s55
    %v57 = vmul.f32 %v26, %v56
    %v58 = vadd.f32 %v54, %v57
    %s59 = sld [smem:[#allocation2 + $0x12]]
    %v60 = vstv %s59
    %v61 = vmul.f32 %v28, %v60
    %v62 = vadd.f32 %v58, %v61
    %64 = vst [vmem:[#allocation1] ss:$4 sm:$0xff] %v62
    %v65 = vld.sshfl [vmem:[#allocation1] sm:$0xff pattern:$0x73625140]
    %v66 = vld.sshfl [vmem:[#allocation1 + $0x8] sm:$0xff pattern:$0x73625140]
    %69 = vrot.lane.b32.xlu0 %v65, 17
    %v70 = vpop.permute.xlu0 %69
    %71 = vrot.lane.b32.xlu0 %v66, 17
    %v72 = vpop.permute.xlu0 %71
    %vm73 = vcmp.lt.s32.totalorder %v30, 17
    %v74 = vsel %vm73, %v70, %v72
    %v75 = vsel %vm73, %v72, %v70
    %v76 = vsel %vm42, 1, 0
    %v77 = vsel %vm43, 1, 0
    %vm78 = vcmp.eq.s32.totalorder %v76, 1
    %vm79 = vcmp.eq.s32.totalorder %v77, 1
    %v80 = vsel %vm78, %v75, 0.0
    %v81 = vsel %vm79, %v74, 0.0
    %v82 = vadd.f32 %v51, %v80
    %v83 = vadd.f32 %v51, %v81
    %s84 = sld [smem:[#allocation2 + $0x1]]
    %v85 = vstv %s84
    %v86 = vmul.f32 %v24, %v85
    %s87 = sld [smem:[#allocation2 + $0xa]]
    %v88 = vstv %s87
    %v89 = vmul.f32 %v26, %v88
    %v90 = vadd.f32 %v86, %v89
    %s91 = sld [smem:[#allocation2 + $0x13]]
    %v92 = vstv %s91
    %v93 = vmul.f32 %v28, %v92
    %v94 = vadd.f32 %v90, %v93
    %96 = vst [vmem:[#allocation1] ss:$4 sm:$0xff] %v94
    %v97 = vld.sshfl [vmem:[#allocation1] sm:$0xff pattern:$0x73625140]
    %v98 = vld.sshfl [vmem:[#allocation1 + $0x8] sm:$0xff pattern:$0x73625140]
    %101 = vrot.lane.b32.xlu0 %v97, 16
    %v102 = vpop.permute.xlu0 %101
    %103 = vrot.lane.b32.xlu0 %v98, 16
    %v104 = vpop.permute.xlu0 %103
    %vm105 = vcmp.lt.s32.totalorder %v30, 16
    %v106 = vsel %vm105, %v102, %v104
    %v107 = vsel %vm105, %v104, %v102
    %v108 = vsel %vm34, 1, 0
    %v109 = vsel %vm35, 1, 0
    %vm110 = vcmp.eq.s32.totalorder %v108, 1
    %vm111 = vcmp.eq.s32.totalorder %v109, 1
    %v112 = vsel %vm110, %v107, 0.0
    %v113 = vsel %vm111, %v106, 0.0
    %v114 = vadd.f32 %v82, %v112
    %v115 = vadd.f32 %v83, %v113
    %s116 = sld [smem:[#allocation2 + $0x2]]
    %v117 = vstv %s116
    %v118 = vmul.f32 %v24, %v117
    %s119 = sld [smem:[#allocation2 + $0xb]]
    %v120 = vstv %s119
    %v121 = vmul.f32 %v26, %v120
    %v122 = vadd.f32 %v118, %v121
    %s123 = sld [smem:[#allocation2 + $0x14]]
    %v124 = vstv %s123
    %v125 = vmul.f32 %v28, %v124
    %v126 = vadd.f32 %v122, %v125
    %128 = vst [vmem:[#allocation1] ss:$4 sm:$0xff] %v126
    %v129 = vld.sshfl [vmem:[#allocation1] sm:$0xff pattern:$0x73625140]
    %v130 = vld.sshfl [vmem:[#allocation1 + $0x8] sm:$0xff pattern:$0x73625140]
    %133 = vrot.lane.b32.xlu0 %v129, 15
    %v134 = vpop.permute.xlu0 %133
    %135 = vrot.lane.b32.xlu0 %v130, 15
    %v136 = vpop.permute.xlu0 %135
    %vm137 = vcmp.lt.s32.totalorder %v30, 15
    %v138 = vsel %vm137, %v134, %v136
    %v139 = vsel %vm137, %v136, %v134
    %v140 = vsel %vm44, 1, 0
    %v141 = vsel %vm45, 1, 0
    %vm142 = vcmp.eq.s32.totalorder %v140, 1
    %vm143 = vcmp.eq.s32.totalorder %v141, 1
    %v144 = vsel %vm142, %v139, 0.0
    %v145 = vsel %vm143, %v138, 0.0
    %v146 = vadd.f32 %v114, %v144
    %v147 = vadd.f32 %v115, %v145
    %s148 = sld [smem:[#allocation2 + $0x3]]
    %v149 = vstv %s148
    %v150 = vmul.f32 %v24, %v149
    %s151 = sld [smem:[#allocation2 + $0xc]]
    %v152 = vstv %s151
    %v153 = vmul.f32 %v26, %v152
    %v154 = vadd.f32 %v150, %v153
    %s155 = sld [smem:[#allocation2 + $0x15]]
    %v156 = vstv %s155
    %v157 = vmul.f32 %v28, %v156
    %v158 = vadd.f32 %v154, %v157
    %160 = vst [vmem:[#allocation1] ss:$4 sm:$0xff] %v158
    %v161 = vld.sshfl [vmem:[#allocation1] sm:$0xff pattern:$0x73625140]
    %v162 = vld.sshfl [vmem:[#allocation1 + $0x8] sm:$0xff pattern:$0x73625140]
    %165 = vrot.lane.b32.xlu0 %v161, 1
    %v166 = vpop.permute.xlu0 %165
    %167 = vrot.lane.b32.xlu0 %v162, 1
    %v168 = vpop.permute.xlu0 %167
    %vm169 = vcmp.lt.s32.totalorder %v30, 1
    %v170 = vsel %vm169, %v166, %v168
    %v171 = vsel %vm169, %v168, %v166
    %v172 = vsel %vm38, 1, 0
    %v173 = vsel %vm39, 1, 0
    %vm174 = vcmp.eq.s32.totalorder %v172, 1
    %vm175 = vcmp.eq.s32.totalorder %v173, 1
    %v176 = vsel %vm174, %v171, 0.0
    %v177 = vsel %vm175, %v170, 0.0
    %v178 = vadd.f32 %v146, %v176
    %v179 = vadd.f32 %v147, %v177
    %s180 = sld [smem:[#allocation2 + $0x4]]
    %v181 = vstv %s180
    %v182 = vmul.f32 %v24, %v181
    %s183 = sld [smem:[#allocation2 + $0xd]]
    %v184 = vstv %s183
    %v185 = vmul.f32 %v26, %v184
    %v186 = vadd.f32 %v182, %v185
    %s187 = sld [smem:[#allocation2 + $0x16]]
    %v188 = vstv %s187
    %v189 = vmul.f32 %v28, %v188
    %v190 = vadd.f32 %v186, %v189
    %192 = vst [vmem:[#allocation1] ss:$4 sm:$0xff] %v190
    %v193 = vld.sshfl [vmem:[#allocation1] sm:$0xff pattern:$0x73625140]
    %v194 = vld.sshfl [vmem:[#allocation1 + $0x8] sm:$0xff pattern:$0x73625140]
    %v197 = vadd.f32 %v178, %v193
    %v198 = vadd.f32 %v179, %v194
    %s199 = sld [smem:[#allocation2 + $0x5]]
    %v200 = vstv %s199
    %v201 = vmul.f32 %v24, %v200
    %s202 = sld [smem:[#allocation2 + $0xe]]
    %v203 = vstv %s202
    %v204 = vmul.f32 %v26, %v203
    %v205 = vadd.f32 %v201, %v204
    %s206 = sld [smem:[#allocation2 + $0x17]]
    %v207 = vstv %s206
    %v208 = vmul.f32 %v28, %v207
    %v209 = vadd.f32 %v205, %v208
    %211 = vst [vmem:[#allocation1] ss:$4 sm:$0xff] %v209
    %v212 = vld.sshfl [vmem:[#allocation1] sm:$0xff pattern:$0x73625140]
    %v213 = vld.sshfl [vmem:[#allocation1 + $0x8] sm:$0xff pattern:$0x73625140]
    %216 = vrot.lane.b32.xlu0 %v212, 127
    %v217 = vpop.permute.xlu0 %216
    %218 = vrot.lane.b32.xlu0 %v213, 127
    %v219 = vpop.permute.xlu0 %218
    %vm220 = vcmp.lt.s32.totalorder %v30, 127
    %v221 = vsel %vm220, %v217, %v219
    %v222 = vsel %vm220, %v219, %v217
    %v223 = vsel %vm40, 1, 0
    %v224 = vsel %vm41, 1, 0
    %vm225 = vcmp.eq.s32.totalorder %v223, 1
    %vm226 = vcmp.eq.s32.totalorder %v224, 1
    %v227 = vsel %vm225, %v221, 0.0
    %v228 = vsel %vm226, %v222, 0.0
    %v229 = vadd.f32 %v197, %v227
    %v230 = vadd.f32 %v198, %v228
    %s231 = sld [smem:[#allocation2 + $0x6]]
    %v232 = vstv %s231
    %v233 = vmul.f32 %v24, %v232
    %s234 = sld [smem:[#allocation2 + $0xf]]
    %v235 = vstv %s234
    %v236 = vmul.f32 %v26, %v235
    %v237 = vadd.f32 %v233, %v236
    %s238 = sld [smem:[#allocation2 + $0x18]]
    %v239 = vstv %s238
    %v240 = vmul.f32 %v28, %v239
    %v241 = vadd.f32 %v237, %v240
    %243 = vst [vmem:[#allocation1] ss:$4 sm:$0xff] %v241
    %v244 = vld.sshfl [vmem:[#allocation1] sm:$0xff pattern:$0x73625140]
    %v245 = vld.sshfl [vmem:[#allocation1 + $0x8] sm:$0xff pattern:$0x73625140]
    %248 = vrot.lane.b32.xlu0 %v244, 113
    %v249 = vpop.permute.xlu0 %248
    %250 = vrot.lane.b32.xlu0 %v245, 113
    %v251 = vpop.permute.xlu0 %250
    %vm252 = vcmp.lt.s32.totalorder %v30, 113
    %v253 = vsel %vm252, %v249, %v251
    %v254 = vsel %vm252, %v251, %v249
    %v255 = vsel %vm46, 1, 0
    %v256 = vsel %vm47, 1, 0
    %vm257 = vcmp.eq.s32.totalorder %v255, 1
    %vm258 = vcmp.eq.s32.totalorder %v256, 1
    %v259 = vsel %vm257, %v253, 0.0
    %v260 = vsel %vm258, %v254, 0.0
    %v261 = vadd.f32 %v229, %v259
    %v262 = vadd.f32 %v230, %v260
    %s263 = sld [smem:[#allocation2 + $0x7]]
    %v264 = vstv %s263
    %v265 = vmul.f32 %v24, %v264
    %s266 = sld [smem:[#allocation2 + $0x10]]
    %v267 = vstv %s266
    %v268 = vmul.f32 %v26, %v267
    %v269 = vadd.f32 %v265, %v268
    %s270 = sld [smem:[#allocation2 + $0x19]]
    %v271 = vstv %s270
    %v272 = vmul.f32 %v28, %v271
    %v273 = vadd.f32 %v269, %v272
    %275 = vst [vmem:[#allocation1] ss:$4 sm:$0xff] %v273
    %v276 = vld.sshfl [vmem:[#allocation1] sm:$0xff pattern:$0x73625140]
    %v277 = vld.sshfl [vmem:[#allocation1 + $0x8] sm:$0xff pattern:$0x73625140]
    %280 = vrot.lane.b32.xlu0 %v276, 112
    %v281 = vpop.permute.xlu0 %280
    %282 = vrot.lane.b32.xlu0 %v277, 112
    %v283 = vpop.permute.xlu0 %282
    %vm284 = vcmp.lt.s32.totalorder %v30, 112
    %v285 = vsel %vm284, %v281, %v283
    %v286 = vsel %vm284, %v283, %v281
    %v287 = vsel %vm36, 1, 0
    %v288 = vsel %vm37, 1, 0
    %vm289 = vcmp.eq.s32.totalorder %v287, 1
    %vm290 = vcmp.eq.s32.totalorder %v288, 1
    %v291 = vsel %vm289, %v285, 0.0
    %v292 = vsel %vm290, %v286, 0.0
    %v293 = vadd.f32 %v261, %v291
    %v294 = vadd.f32 %v262, %v292
    %s295 = sld [smem:[#allocation2 + $0x8]]
    %v296 = vstv %s295
    %v297 = vmul.f32 %v24, %v296
    %s298 = sld [smem:[#allocation2 + $0x11]]
    %v299 = vstv %s298
    %v300 = vmul.f32 %v26, %v299
    %v301 = vadd.f32 %v297, %v300
    %s302 = sld [smem:[#allocation2 + $0x1a]]
    %v303 = vstv %s302
    %v304 = vmul.f32 %v28, %v303
    %v305 = vadd.f32 %v301, %v304
    %307 = vst [vmem:[#allocation1] ss:$4 sm:$0xff] %v305
    %v308 = vld.sshfl [vmem:[#allocation1] sm:$0xff pattern:$0x73625140]
    %v309 = vld.sshfl [vmem:[#allocation1 + $0x8] sm:$0xff pattern:$0x73625140]
    %312 = vrot.lane.b32.xlu0 %v308, 111
    %v313 = vpop.permute.xlu0 %312
    %314 = vrot.lane.b32.xlu0 %v309, 111
    %v315 = vpop.permute.xlu0 %314
    %vm316 = vcmp.lt.s32.totalorder %v30, 111
    %v317 = vsel %vm316, %v313, %v315
    %v318 = vsel %vm316, %v315, %v313
    %v319 = vsel %vm48, 1, 0
    %v320 = vsel %vm49, 1, 0
    %vm321 = vcmp.eq.s32.totalorder %v319, 1
    %vm322 = vcmp.eq.s32.totalorder %v320, 1
    %v323 = vsel %vm321, %v317, 0.0
    %v324 = vsel %vm322, %v318, 0.0
    %v325 = vadd.f32 %v293, %v323
    %v326 = vadd.f32 %v294, %v324
    %v329 = vrot.slane %v326, 6
    %vm330 = vcmask 1041408
    %v331 = vsel %vm330, %v325, %v329
    %333 = vst [vmem:[%s2] sm:$0xf] %v331
    // Predicated region
    $region14: #{conv2d_3to1_pallas.1} parent=1 // pred_check
      _
    $region15: #{conv2d_3to1_pallas.1} parent=1 // pred_check_branch
      %335 = sbr.rel (0) target = $region17
    $region16: #{conv2d_3to1_pallas.1} parent=1 // pred_region
      _
    $region17: #{conv2d_3to1_pallas.1} parent=1 // pred_fallthru
      _
    // Predicated region
    $region18: #{conv2d_3to1_pallas.1} parent=1 // pred_check
      _
    $region19: #{conv2d_3to1_pallas.1} parent=1 // pred_check_branch
      %337 = sbr.rel (0) target = $region21
    $region20: #{conv2d_3to1_pallas.1} parent=1 // pred_region
      _
    $region21: #{conv2d_3to1_pallas.1} parent=1 // pred_fallthru
      _
    %338 = vsyncpa [#allocation3], 1

</llo_original>
